<compile_context>
chip_gen: v5e
topology: v5e:2x2
jax: 0.10.0
libtpu: 0.0.40
codegen_flags: <defaults>
</compile_context>

<pallas_src>
import jax
import jax.numpy as jnp
from jax import lax
from jax.experimental import pallas as pl
from jax.experimental.pallas import tpu as pltpu


def _make_step_kernel(chunk: int, n_chunks: int):
    """Kernel factory closing over static chunking parameters."""

    def kernel(x_ref, d_ref, bias_ref, smooth_ref, o_ref):
        # x_ref: (block_rows, D) VMEM, d_ref: (1, D) VMEM,
        # bias/smooth: (1,) SMEM scalars, o_ref: (1, n_chunks, chunk) VMEM.
        d = d_ref[...]                      # hoisted: loaded once per grid step
        bias = bias_ref[0]
        smooth = smooth_ref[0]

        def chunk_row(xc):
            # xc: (chunk, D) -> lane-dense (1, chunk) of sigmoid(s*(x.d - b)).
            proj = jnp.sum((xc * d).astype(jnp.float32), axis=-1, keepdims=True)
            sig = jax.nn.sigmoid(smooth * (proj - bias))        # (chunk, 1) f32
            return jnp.transpose(sig)                           # (1, chunk) via XLU

        if n_chunks == 1:
            row = chunk_row(x_ref[...])
            o_ref[...] = row.reshape(1, 1, chunk).astype(o_ref.dtype)
        else:
            def body(c, carry):
                off = pl.multiple_of(c * chunk, chunk)
                row = chunk_row(x_ref[pl.ds(off, chunk), :])
                o_ref[:, pl.ds(c, 1), :] = (
                    row.reshape(1, 1, chunk).astype(o_ref.dtype))
                return carry
            lax.fori_loop(0, n_chunks, body, None, unroll=False)

    return kernel


def step_function_node(x: jnp.ndarray,
                       direction: jnp.ndarray,
                       bias,
                       smoothing,
                       *,
                       tile_budget_bytes: int = 8 * 1024 * 1024) -> jnp.ndarray:
    """Pallas implementation of StepFunctionNode.forward.

    x: (batch, input_dim), direction: (input_dim,), bias/smoothing scalars.
    Returns (batch, 1) in x.dtype.
    """
    batch, input_dim = x.shape
    assert direction.shape == (input_dim,)

    itemsize = jnp.dtype(x.dtype).itemsize
    row_bytes = input_dim * itemsize
    CHUNK = 1024  # in-kernel chunk size (lane-dense output granularity)

    # Rows per x tile from the byte budget (multiple of 8 for sublane alignment).
    # TODO(synk): extremely wide input_dim (rows_cap < 8 within budget) would
    # need reduction-axis (input_dim) tiling; not implemented here.
    rows_cap = max(8, (tile_budget_bytes // max(row_bytes, 1)) // 8 * 8)
    # Aim for >= 2 grid steps so both v7x TensorCores get work (harmless on
    # single-TC v5e/v6e).
    half = ((batch + 1) // 2 + 7) // 8 * 8
    block_rows = max(8, min(rows_cap, half))
    block_rows = min(block_rows, batch)
    if block_rows >= CHUNK:
        chunk = CHUNK
        block_rows = (block_rows // CHUNK) * CHUNK
    else:
        chunk = block_rows
    n_chunks = block_rows // chunk
    num_blocks = -(-batch // block_rows)
    padded = num_blocks * block_rows

    d2 = direction.reshape(1, input_dim).astype(x.dtype)
    bias_s = jnp.asarray(bias, jnp.float32).reshape(1)
    smooth_s = jnp.asarray(smoothing, jnp.float32).reshape(1)

    # Explicit VMEM limit: 2x double-buffered x tile + 2x (sublane-padded)
    # output buffers + direction + slack for chunk-sized temporaries.
    x_tile_bytes = block_rows * row_bytes
    out_tile_bytes = max(n_chunks, 8) * max(chunk, 128) * itemsize
    need = (2 * x_tile_bytes + 2 * out_tile_bytes
            + 2 * 8 * input_dim * itemsize + (6 << 20))
    vmem_limit = int(min(max(need, 16 << 20), 48 << 20))

    out = pl.pallas_call(
        _make_step_kernel(chunk, n_chunks),
        out_shape=jax.ShapeDtypeStruct((num_blocks, n_chunks, chunk), x.dtype),
        grid=(num_blocks,),
        in_specs=[
            pl.BlockSpec((block_rows, input_dim), lambda i: (i, 0)),   # x tile
            pl.BlockSpec((1, input_dim), lambda i: (0, 0)),            # direction
            pl.BlockSpec(memory_space=pltpu.MemorySpace.SMEM),         # bias
            pl.BlockSpec(memory_space=pltpu.MemorySpace.SMEM),         # smoothing
        ],
        out_specs=pl.BlockSpec((1, n_chunks, chunk), lambda i: (i, 0, 0)),
        compiler_params=pltpu.CompilerParams(
            dimension_semantics=("parallel",),
            vmem_limit_bytes=vmem_limit,
        ),
    )(x, d2, bias_s, smooth_s)

    flat = out.reshape(padded)
    if padded != batch:
        flat = flat[:batch]   # drop padded tail rows from the last block
    return flat.reshape(batch, 1)


if __name__ == "__main__":
    key = jax.random.PRNGKey(0)
    k_x, k_d, k_x2 = jax.random.split(key, 3)

    # Small shapes consistent with the module: batch=8, input_dim=32.
    batch, input_dim = 8, 32
    x = jax.random.normal(k_x, (batch, input_dim), dtype=jnp.float32)
    direction = jax.random.normal(k_d, (input_dim,), dtype=jnp.float32)
    bias = 0.25
    smoothing = 10.0

    y = step_function_node(x, direction, bias, smoothing)
    jax.block_until_ready(y)
    ref = jax.nn.sigmoid(smoothing * (x @ direction - bias))[:, None]
    assert y.shape == (batch, 1) and y.dtype == x.dtype
    assert bool(jnp.allclose(y, ref, atol=1e-5, rtol=1e-5))

    # Also exercise the multi-block / in-kernel-chunked (lane-dense) path.
    batch2 = 4096
    x2 = jax.random.normal(k_x2, (batch2, input_dim), dtype=jnp.float32)
    y2 = step_function_node(x2, direction, bias, smoothing)
    jax.block_until_ready(y2)
    ref2 = jax.nn.sigmoid(smoothing * (x2 @ direction - bias))[:, None]
    assert y2.shape == (batch2, 1) and y2.dtype == x2.dtype
    assert bool(jnp.allclose(y2, ref2, atol=1e-5, rtol=1e-5))

    print("KERNEL_OK")
</pallas_src>

<mosaic_0001>
module attributes {stable_mosaic.version = 11 : i64} {
  func.func @kernel(%arg0: i32, %arg1: memref<8x32xf32, #tpu.memory_space<vmem>>, %arg2: memref<1x32xf32, #tpu.memory_space<vmem>>, %arg3: memref<1xf32, #tpu.memory_space<smem>>, %arg4: memref<1xf32, #tpu.memory_space<smem>>, %arg5: memref<1x1x8xf32, #tpu.memory_space<vmem>>) attributes {dimension_semantics = [#tpu.dimension_semantics<parallel>], iteration_bounds = array<i64: 1>, scalar_prefetch = 0 : i64, scratch_operands = 0 : i64, tpu.core_type = #tpu.core_type<tc>, window_params = [{transform_indices = @transform_0, window_bounds = array<i64: 8, 32>}, {pipeline_mode = #tpu.pipeline_mode<synchronous>, transform_indices = @transform_1, window_bounds = array<i64: 1, 32>}, {transform_indices = @transform_2, window_bounds = array<i64: 1>}, {transform_indices = @transform_3, window_bounds = array<i64: 1>}, {transform_indices = @transform_4, window_bounds = array<i64: 1, 1, 8>}]} {
    %c0 = arith.constant 0 : index
    %c0_0 = arith.constant 0 : index
    %0 = vector.load %arg2[%c0, %c0_0] : memref<1x32xf32, #tpu.memory_space<vmem>>, vector<1x32xf32>
    %c0_1 = arith.constant 0 : index
    %1 = memref.load %arg3[%c0_1] : memref<1xf32, #tpu.memory_space<smem>>
    %c0_2 = arith.constant 0 : index
    %2 = memref.load %arg4[%c0_2] : memref<1xf32, #tpu.memory_space<smem>>
    %c0_3 = arith.constant 0 : index
    %c0_4 = arith.constant 0 : index
    %3 = vector.load %arg1[%c0_3, %c0_4] : memref<8x32xf32, #tpu.memory_space<vmem>>, vector<8x32xf32>
    %4 = vector.broadcast %0 : vector<1x32xf32> to vector<8x32xf32>
    %5 = arith.mulf %3, %4 : vector<8x32xf32>
    %cst = arith.constant dense<0.000000e+00> : vector<8xf32>
    %6 = vector.multi_reduction <add>, %5, %cst [1] : vector<8x32xf32> to vector<8xf32>
    %7 = vector.shape_cast %6 : vector<8xf32> to vector<8x1xf32>
    %8 = vector.broadcast %1 : f32 to vector<8x1xf32>
    %9 = arith.subf %7, %8 : vector<8x1xf32>
    %10 = vector.broadcast %2 : f32 to vector<8x1xf32>
    %11 = arith.mulf %10, %9 : vector<8x1xf32>
    %12 = arith.negf %11 : vector<8x1xf32>
    %13 = math.exp %12 : vector<8x1xf32>
    %cst_5 = arith.constant 1.000000e+00 : f32
    %14 = vector.broadcast %cst_5 : f32 to vector<8x1xf32>
    %15 = arith.addf %14, %13 : vector<8x1xf32>
    %16 = arith.divf %14, %15 : vector<8x1xf32>
    %17 = tpu.transpose %16, [1, 0] : vector<8x1xf32> -> vector<1x8xf32>
    %18 = vector.shape_cast %17 : vector<1x8xf32> to vector<1x1x8xf32>
    %c0_6 = arith.constant 0 : index
    %c0_7 = arith.constant 0 : index
    %c0_8 = arith.constant 0 : index
    %19 = vector.load %arg5[%c0_6, %c0_7, %c0_8] : memref<1x1x8xf32, #tpu.memory_space<vmem>>, vector<1x1x8xf32>
    tpu.vector_store %arg5[%c0_6, %c0_7, %c0_8], %18 {strides = array<i32>} : memref<1x1x8xf32, #tpu.memory_space<vmem>>, vector<1x1x8xf32>,
    return
  }
  func.func @transform_0(%arg0: i32) -> (i32, i32) {
    %c0_i32 = arith.constant 0 : i32
    %c0_i32_0 = arith.constant 0 : i32
    return %arg0, %c0_i32 : i32, i32
  }
  func.func @transform_1(%arg0: i32) -> (i32, i32) {
    %c0_i32 = arith.constant 0 : i32
    %c0_i32_0 = arith.constant 0 : i32
    %c0_i32_1 = arith.constant 0 : i32
    return %c0_i32, %c0_i32_0 : i32, i32
  }
  func.func @transform_2(%arg0: i32) -> i32 {
    %c0_i32 = arith.constant 0 : i32
    %c0_i32_0 = arith.constant 0 : i32
    return %c0_i32 : i32
  }
  func.func @transform_3(%arg0: i32) -> i32 {
    %c0_i32 = arith.constant 0 : i32
    %c0_i32_0 = arith.constant 0 : i32
    return %c0_i32 : i32
  }
  func.func @transform_4(%arg0: i32) -> (i32, i32, i32) {
    %c0_i32 = arith.constant 0 : i32
    %c0_i32_0 = arith.constant 0 : i32
    %c0_i32_1 = arith.constant 0 : i32
    return %arg0, %c0_i32, %c0_i32_0 : i32, i32, i32
  }
}

</mosaic_0001>

<llo_original>
// kernel: tpu_custom_call.1
$region0: #{tpu_custom_call.1}
  #allocation0 [shape = 'u32[]', space=smem, size = 0x4, offset = 0x4, fixed_abs, tag = 'smem constant byte address 0x4 - core index']
  #allocation1 [shape = 'u32[72,128]{1,0:T(1,128)}', space=vmem, size = 0x9000, scoped, tag = 'internal scratch']
  #allocation2 [shape = 'f32[1]{0:T(128)S(6)}', space=smem, size = 0x200, scoped, tag = 'scoped memory for tpu_custom_call.1']
  #allocation3 [shape = 'f32[1]{0:T(128)S(6)}', space=smem, size = 0x200, scoped, tag = 'scoped memory for tpu_custom_call.1']
  %s0 = inlined_call_operand.hbm [shape: f32[8,32], index: 0, kind: input, shape index: {}]
  %s1 = inlined_call_operand.vmem [shape: f32[1,32], index: 1, kind: input, shape index: {}]
  %s2 = inlined_call_operand.<no memory space> [shape: f32[1], index: 2, kind: input, shape index: {}]
  %s3 = inlined_call_operand.<no memory space> [shape: f32[1], index: 3, kind: input, shape index: {}]
  %s4 = inlined_call_operand.hbm [shape: f32[1,1,8], index: 4, kind: output, shape index: {}]
  %s5 = sld [smem:[#allocation0]]
  $region30: #{tpu_custom_call.1} parent=0
    _
  %s7 = ssub.s32 1, %s5
  %s8 = scalar_select 0, %s7, %s5
  %9 = sst [smem:[#allocation2]] %s2
  %10 = sst [smem:[#allocation3]] %s3
  $region1: #{tpu_custom_call.1} parent=0
    #allocation4 [shape = 'u8[4096]{0}', space=vmem, size = 0x1000, scoped, tag = 'input window, operand 0, single buffered']
    #allocation5 [shape = 's32[1]{0}', space=sflag, size = 0x4, scoped, tag = 'scoped memory for tpu_custom_call.1']
    #allocation6 [shape = 's32[1]{0}', space=sflag, size = 0x4, scoped, tag = 'scoped memory for tpu_custom_call.1']
    #allocation7 [shape = 'u8[512]{0}', space=vmem, size = 0x400, scoped, tag = 'output window, operand 0, single buffered']
    %11 = vsyncpa [#allocation5], 0
    %12 = vsyncpa [#allocation6], 0
    // Predicated region
    $region2: #{tpu_custom_call.1} parent=1 // pred_check
      _
    $region3: #{tpu_custom_call.1} parent=1 // pred_check_branch
      %14 = sbr.rel (0) target = $region5
    $region4: #{tpu_custom_call.1} parent=1 // pred_region
      %16 = vsyncadd [#allocation5], 0
      %s18 = sshll.u32 %s0, 4
      %s19 = int_to_ptr.hbm [resolvable:$true] %s18
      %s20 = sshll.u32 [#allocation4], 4
      %s21 = int_to_ptr.vmem [resolvable:$true] %s20
      %23 = dma.hbm_to_vmem [thread:$0]  %s19, 128, %s21, [#allocation5]
    $region5: #{tpu_custom_call.1} parent=1 // pred_fallthru
      _
    // Predicated region
    $region6: #{tpu_custom_call.1} parent=1 // pred_check
      _
    $region7: #{tpu_custom_call.1} parent=1 // pred_check_branch
      %25 = sbr.rel (0) target = $region9
    $region8: #{tpu_custom_call.1} parent=1 // pred_region
      _
    $region9: #{tpu_custom_call.1} parent=1 // pred_fallthru
      _
    // Predicated region
    $region10: #{tpu_custom_call.1} parent=1 // pred_check
      _
    $region11: #{tpu_custom_call.1} parent=1 // pred_check_branch
      %27 = sbr.rel (0) target = $region13
    $region12: #{tpu_custom_call.1} parent=1 // pred_region
      _
    $region13: #{tpu_custom_call.1} parent=1 // pred_fallthru
      _
    // Predicated region
    $region14: #{tpu_custom_call.1} parent=1 // pred_check
      _
    $region15: #{tpu_custom_call.1} parent=1 // pred_check_branch
      %29 = sbr.rel (0) target = $region17
    $region16: #{tpu_custom_call.1} parent=1 // pred_region
      _
    $region17: #{tpu_custom_call.1} parent=1 // pred_fallthru
      _
    // Predicated region
    $region18: #{tpu_custom_call.1} parent=1 // pred_check
      _
    $region19: #{tpu_custom_call.1} parent=1 // pred_check_branch
      %31 = sbr.rel (0) target = $region21
    $region20: #{tpu_custom_call.1} parent=1 // pred_region
      %33 = dma.done [#allocation5], 128
    $region21: #{tpu_custom_call.1} parent=1 // pred_fallthru
      _
    %v34 = vld [vmem:[%s1] sm:$0x1]
    %s35 = sld [smem:[#allocation2]]
    %s36 = sld [smem:[#allocation3]]
    %v37 = vld [vmem:[#allocation4] sm:$0xff]
    %v39 = vperm.slane %v34, 0
    %v41 = vmul.f32 %v37, %v39
    %vm42 = vcmask 261120
    %v43 = vsel %vm42, %v41, 0.0
    %44 = vadd.xlane.f32.xlu0 %v43
    %v45 = vpop.xlane.xlu0 %44
    %v46 = vstv %s35
    %v47 = vsub.f32 %v45, %v46
    %v48 = vstv %s36
    %v49 = vmul.f32 %v48, %v47
    %v50 = vxor.u32 %v49, 2147483648
    %v51 = vmul.f32 %v50, 1.442695
    %v52 = vpow.pop %v51
    %v53 = vadd.f32 %v52, 1.0
    %v54 = vrcp.pop %v53
    %v55 = vmul.f32 %v53, %v54
    %v56 = vsub.f32 1.0, %v55
    %v57 = vmul.f32 %v54, %v56
    %v58 = vadd.f32 %v54, %v57
    %vm59 = vweird.f32 %v53
    %vm60 = vweird.f32 %v54
    %vm61 = vmor %vm59, %vm60
    %v62 = vsel %vm61, %v54, %v58
    %v63 = vand.u32 2147483647, %v53
    %vm64 = vcmp.eq.f32.partialorder %v63, 8.507059e+37
    %v65 = vand.u32 %v53, 2147483648
    %v66 = vor.u32 1.1754944e-38, %v65
    %v67 = vsel %vm64, %v66, %v62
    %v68 = vmul.f32 1.0, %v67
    %69 = vxpose.xlu0.b32.start [1/16] %v68, 128
    %70 = vxpose.xlu0.b32.cont [2/16] 0.0, 128
    %71 = vxpose.xlu0.b32.cont [3/16] 0.0, 128
    %72 = vxpose.xlu0.b32.cont [4/16] 0.0, 128
    %73 = vxpose.xlu0.b32.cont [5/16] 0.0, 128
    %74 = vxpose.xlu0.b32.cont [6/16] 0.0, 128
    %75 = vxpose.xlu0.b32.cont [7/16] 0.0, 128
    %76 = vxpose.xlu0.b32.cont [8/16] 0.0, 128
    %77 = vxpose.xlu0.b32.cont [9/16] 0.0, 128
    %78 = vxpose.xlu0.b32.cont [10/16] 0.0, 128
    %79 = vxpose.xlu0.b32.cont [11/16] 0.0, 128
    %80 = vxpose.xlu0.b32.cont [12/16] 0.0, 128
    %81 = vxpose.xlu0.b32.cont [13/16] 0.0, 128
    %82 = vxpose.xlu0.b32.cont [14/16] 0.0, 128
    %83 = vxpose.xlu0.b32.cont [15/16] 0.0, 128
    %84 = vxpose.xlu0.b32.end [16/16] 0.0, 128
    %v85 = vpop.trf.xlu0
    %v86 = vpop.trf.xlu0
    %v87 = vpop.trf.xlu0
    %v88 = vpop.trf.xlu0
    %v89 = vpop.trf.xlu0
    %v90 = vpop.trf.xlu0
    %v91 = vpop.trf.xlu0
    %v92 = vpop.trf.xlu0
    %v93 = vpop.trf.xlu0
    %v94 = vpop.trf.xlu0
    %v95 = vpop.trf.xlu0
    %v96 = vpop.trf.xlu0
    %v97 = vpop.trf.xlu0
    %v98 = vpop.trf.xlu0
    %v99 = vpop.trf.xlu0
    %v100 = vpop.trf.xlu0
    %vm101 = vcmask 57344
    %102 = vst.msk [vmem:[#allocation7] sm:$0x1] %vm101, %v85
    // Predicated region
    $region22: #{tpu_custom_call.1} parent=1 // pred_check
      _
    $region23: #{tpu_custom_call.1} parent=1 // pred_check_branch
      %104 = sbr.rel (0) target = $region25
    $region24: #{tpu_custom_call.1} parent=1 // pred_region
      %106 = vsyncadd [#allocation6], 0
      %s108 = sshll.u32 [#allocation7], 4
      %s109 = int_to_ptr.vmem [resolvable:$true] %s108
      %s110 = sshll.u32 %s4, 4
      %s111 = int_to_ptr.hbm [resolvable:$true] %s110
      %113 = dma.vmem_to_hbm [thread:$0]  %s109, 16, %s111, [#allocation6]
    $region25: #{tpu_custom_call.1} parent=1 // pred_fallthru
      _
    // Predicated region
    $region26: #{tpu_custom_call.1} parent=1 // pred_check
      _
    $region27: #{tpu_custom_call.1} parent=1 // pred_check_branch
      %115 = sbr.rel (0) target = $region29
    $region28: #{tpu_custom_call.1} parent=1 // pred_region
      %117 = dma.done [#allocation6], 16
    $region29: #{tpu_custom_call.1} parent=1 // pred_fallthru
      _
    %118 = vsyncpa [#allocation5], 1
    %119 = vsyncpa [#allocation6], 1

</llo_original>
